<compile_context>
chip_gen: v7x
topology: tpu7x:2x2x1
jax: 0.10.0
libtpu: 0.0.40
codegen_flags: <defaults>
</compile_context>

<pallas_src>
import jax
import jax.numpy as jnp
from jax.experimental import pallas as pl
from jax.experimental.pallas import tpu as pltpu

_LANES = 128
# ~2 MiB per block: near HBM roofline on v5e/v6e/v7x, and 2 buffers x (in + out)
# x 2 MiB = 8 MiB fits comfortably under v5e's 16 MiB default scoped VMEM.
_TARGET_BLOCK_BYTES = 2 * 1024 * 1024


def _round_kernel(x_ref, o_ref):
    o_ref[...] = jnp.round(x_ref[...])


def _sublane_quantum(dtype):
    """Minimum row multiple for a clean (sublane, 128) tile for this dtype."""
    itemsize = jnp.dtype(dtype).itemsize
    return max(8, 8 * (4 // max(itemsize, 1)))  # 8 for f32, 16 for bf16, 32 for 8-bit


def _round_pallas_2d(slab):
    """slab: (rows, 128), rows a multiple of the dtype's sublane quantum."""
    rows, lanes = slab.shape
    itemsize = jnp.dtype(slab.dtype).itemsize
    quantum = _sublane_quantum(slab.dtype)

    # Block rows: ~2 MiB worth, aligned to the sublane quantum, capped at the array size.
    target_rows = max(
        quantum, (_TARGET_BLOCK_BYTES // (lanes * itemsize)) // quantum * quantum
    )
    tile_rows = min(target_rows, rows)
    grid = (pl.cdiv(rows, tile_rows),)

    return pl.pallas_call(
        _round_kernel,
        out_shape=jax.ShapeDtypeStruct((rows, lanes), slab.dtype),
        grid_spec=pltpu.PrefetchScalarGridSpec(
            num_scalar_prefetch=0,
            grid=grid,
            in_specs=[pl.BlockSpec((tile_rows, lanes), lambda i: (i, 0))],
            out_specs=pl.BlockSpec((tile_rows, lanes), lambda i: (i, 0)),
        ),
        compiler_params=pltpu.CompilerParams(
            dimension_semantics=("parallel",),  # shards the grid across v7x's 2 TCs
        ),
        cost_estimate=pl.CostEstimate(
            flops=0,
            transcendentals=0,
            bytes_accessed=2 * rows * lanes * itemsize,
        ),
    )(slab)


def _round_forward(x):
    orig_shape = x.shape
    n = x.size
    if n == 0:
        return x

    quantum = _sublane_quantum(x.dtype)
    chunk = _LANES * quantum
    n_bulk = (n // chunk) * chunk
    flat = x.reshape(-1)

    if n_bulk == 0:
        # Tiny ragged input: no kernel benefit, just round it.
        return jnp.round(x)

    slab_src = flat if n_bulk == n else flat[:n_bulk]
    bulk = _round_pallas_2d(slab_src.reshape(n_bulk // _LANES, _LANES)).reshape(-1)

    if n_bulk == n:
        # Aligned common case: no pad, no tail slice -> no extra HBM copies.
        return bulk.reshape(orig_shape)

    tail = jnp.round(flat[n_bulk:])
    return jnp.concatenate([bulk, tail]).reshape(orig_shape)


@jax.custom_vjp
def round_ste(x):
    """Element-wise rounding with a straight-through (identity) gradient."""
    return _round_forward(x)


def _round_ste_fwd(x):
    return _round_forward(x), None


def _round_ste_bwd(_, g):
    return (g,)  # STE: gradient passes straight through


round_ste.defvjp(_round_ste_fwd, _round_ste_bwd)


if __name__ == "__main__":
    key = jax.random.PRNGKey(0)
    # NCHW input, small shape consistent with a conv-style activation tensor.
    x = jax.random.normal(key, (2, 4, 16, 16), dtype=jnp.float32) * 5.0

    y = jax.block_until_ready(round_ste(x))

    # Forward check against plain JAX (matches torch.round semantics).
    y_ref = jnp.round(x)
    assert y.shape == x.shape and y.dtype == x.dtype
    assert jnp.array_equal(y, y_ref), "mismatch vs jnp.round reference"

    # STE gradient check: d/dx sum(2 * round_ste(x)) == 2 everywhere.
    g = jax.block_until_ready(jax.grad(lambda t: jnp.sum(2.0 * round_ste(t)))(x))
    assert jnp.allclose(g, 2.0), "STE gradient is not identity"

    print("KERNEL_OK")
</pallas_src>

<mosaic_0001>
module attributes {stable_mosaic.version = 11 : i64} {
  func.func @_round_kernel(%arg0: i32, %arg1: memref<16x128xf32, #tpu.memory_space<vmem>>, %arg2: memref<16x128xf32, #tpu.memory_space<vmem>>) attributes {dimension_semantics = [#tpu.dimension_semantics<parallel>], iteration_bounds = array<i64: 1>, scalar_prefetch = 0 : i64, scratch_operands = 0 : i64, tpu.core_type = #tpu.core_type<tc>, window_params = [{transform_indices = @transform_0, window_bounds = array<i64: 16, 128>}, {transform_indices = @transform_1, window_bounds = array<i64: 16, 128>}]} {
    %c0 = arith.constant 0 : index
    %c0_0 = arith.constant 0 : index
    %0 = vector.load %arg1[%c0, %c0_0] : memref<16x128xf32, #tpu.memory_space<vmem>>, vector<16x128xf32>
    %1 = math.roundeven %0 : vector<16x128xf32>
    %c0_1 = arith.constant 0 : index
    %c0_2 = arith.constant 0 : index
    %2 = vector.load %arg2[%c0_1, %c0_2] : memref<16x128xf32, #tpu.memory_space<vmem>>, vector<16x128xf32>
    tpu.vector_store %arg2[%c0_1, %c0_2], %1 {strides = array<i32>} : memref<16x128xf32, #tpu.memory_space<vmem>>, vector<16x128xf32>,
    return
  }
  func.func @transform_0(%arg0: i32) -> (i32, i32) {
    %c0_i32 = arith.constant 0 : i32
    %c0_i32_0 = arith.constant 0 : i32
    return %arg0, %c0_i32 : i32, i32
  }
  func.func @transform_1(%arg0: i32) -> (i32, i32) {
    %c0_i32 = arith.constant 0 : i32
    %c0_i32_0 = arith.constant 0 : i32
    return %arg0, %c0_i32 : i32, i32
  }
}

</mosaic_0001>

<llo_original>
// kernel: tpu_custom_call.1
$region0: #{tpu_custom_call.1}
  #allocation0 [shape = 'u32[]', space=smem, size = 0x4, offset = 0x4, fixed_abs, tag = 'smem constant byte address 0x4 - core index']
  #allocation1 [shape = 'u32[144,128]{1,0:T(1,128)}', space=vmem, size = 0x12000, scoped, tag = 'internal scratch']
  %s0 = inlined_call_operand.hbm [shape: f32[16,128], index: 0, kind: input, shape index: {}]
  %s1 = inlined_call_operand.hbm [shape: f32[16,128], index: 1, kind: output, shape index: {}]
  %s2 = sld [smem:[#allocation0]]
  $region18: #{tpu_custom_call.1} parent=0
    _
  %s4 = ssub.s32 1, %s2
  %s5 = scalar_select 0, %s4, %s2
  $region1: #{tpu_custom_call.1} parent=0
    #allocation2 [shape = 'u8[8192]{0}', space=vmem, size = 0x2000, scoped, tag = 'input window, operand 0, single buffered']
    #allocation3 [shape = 's32[1]{0}', space=sflag, size = 0x4, scoped, tag = 'scoped memory for tpu_custom_call.1']
    #allocation4 [shape = 's32[1]{0}', space=sflag, size = 0x4, scoped, tag = 'scoped memory for tpu_custom_call.1']
    #allocation5 [shape = 'u8[8192]{0}', space=vmem, size = 0x2000, scoped, tag = 'output window, operand 0, single buffered']
    %6 = vsyncpa [#allocation3], 0
    %7 = vsyncpa [#allocation4], 0
    // Predicated region
    $region2: #{tpu_custom_call.1} parent=1 // pred_check
      _
    $region3: #{tpu_custom_call.1} parent=1 // pred_check_branch
      %9 = sbr.rel (0) target = $region5
    $region4: #{tpu_custom_call.1} parent=1 // pred_region
      %s11 = ssub.s32 256, 256
      %12 = vsyncadd [#allocation3], %s11
      %s13 = sshll.u32 [#allocation2], 4
      %s14 = int_to_ptr.vmem [resolvable:$true] %s13
      %19 = dma.hbm_to_vmem [thread:$0]  %s0, 256, %s14, [#allocation3], 128, 128, 8
    $region5: #{tpu_custom_call.1} parent=1 // pred_fallthru
      _
    // Predicated region
    $region6: #{tpu_custom_call.1} parent=1 // pred_check
      _
    $region7: #{tpu_custom_call.1} parent=1 // pred_check_branch
      %21 = sbr.rel (0) target = $region9
    $region8: #{tpu_custom_call.1} parent=1 // pred_region
      %22 = dma.done [#allocation3], 256
    $region9: #{tpu_custom_call.1} parent=1 // pred_fallthru
      _
    %v23 = vld [vmem:[#allocation2] sm:$0xff]
    %v24 = vld [vmem:[#allocation2 + $0x8] sm:$0xff]
    %v25 = vround.ne.pseudo %v23
    %v26 = vround.ne.pseudo %v24
    %27 = vst [vmem:[#allocation5] sm:$0xff] %v25
    %28 = vst [vmem:[#allocation5 + $0x8] sm:$0xff] %v26
    // Predicated region
    $region10: #{tpu_custom_call.1} parent=1 // pred_check
      _
    $region11: #{tpu_custom_call.1} parent=1 // pred_check_branch
      %30 = sbr.rel (0) target = $region13
    $region12: #{tpu_custom_call.1} parent=1 // pred_region
      %s32 = ssub.s32 256, 256
      %33 = vsyncadd [#allocation4], %s32
      %s34 = sshll.u32 [#allocation5], 4
      %s35 = int_to_ptr.vmem [resolvable:$true] %s34
      %40 = dma.vmem_to_hbm [thread:$0]  %s35, 256, %s1, [#allocation4], 128, 128, 8
    $region13: #{tpu_custom_call.1} parent=1 // pred_fallthru
      _
    // Predicated region
    $region14: #{tpu_custom_call.1} parent=1 // pred_check
      _
    $region15: #{tpu_custom_call.1} parent=1 // pred_check_branch
      %42 = sbr.rel (0) target = $region17
    $region16: #{tpu_custom_call.1} parent=1 // pred_region
      %43 = dma.done [#allocation4], 256
    $region17: #{tpu_custom_call.1} parent=1 // pred_fallthru
      _
    %44 = vsyncpa [#allocation3], 1
    %45 = vsyncpa [#allocation4], 1

</llo_original>
